<compile_context>
chip_gen: v6e
topology: v6e:2x2x1
jax: 0.10.0
libtpu: 0.0.40
codegen_flags: <defaults>
</compile_context>

<pallas_src>
import jax
import jax.numpy as jnp
import numpy as np
from jax.experimental import pallas as pl
from jax.experimental.pallas import tpu as pltpu


def _pam_kernel(scal_ref, w2_ref, pt_ref, ptt_ref, pf_ref, pft_ref, x_ref, o_ref):
    # scal_ref (SMEM, (5,)): [bias_T, bias_F, a, b, c]
    # w2_ref  (VMEM, (2, C)): stacked 1x1-conv weights (row 0 = T, row 1 = F)
    # pt_ref  (VMEM, (L, W)): (1/H) * one_hot(l % W)   -> mean over H
    # ptt_ref (VMEM, (W, L)): one_hot(l % W).T         -> broadcast w -> l
    # pf_ref  (VMEM, (L, H)): (1/W) * one_hot(l // W)  -> mean over W
    # pft_ref (VMEM, (H, L)): one_hot(l // W).T        -> broadcast h -> l
    # x_ref / o_ref (VMEM, (Nb, C, L)): Nb flattened batch elements.
    b_t = scal_ref[0]
    b_f = scal_ref[1]
    a = scal_ref[2]
    b = scal_ref[3]
    c = scal_ref[4]

    w2 = w2_ref[...]
    p_t = pt_ref[...]
    p_tt = ptt_ref[...]
    p_f = pf_ref[...]
    p_ft = pft_ref[...]

    nb = x_ref.shape[0]
    for n in range(nb):                              # static unroll; nb is small
        xn = x_ref[n].astype(jnp.float32)            # (C, L)
        # 1x1 convs: channel contraction on the MXU (one pass over x).
        v = jnp.dot(w2, xn, preferred_element_type=jnp.float32)            # (2, L)
        # Mean over H (resp. W) via selector matmul; bias added after the mean
        # (exact, since each selector column averages exactly H (resp. W) taps).
        v_t = jax.nn.sigmoid(
            jnp.dot(v[0:1, :], p_t, preferred_element_type=jnp.float32) + b_t)  # (1, W)
        v_f = jax.nn.sigmoid(
            jnp.dot(v[1:2, :], p_f, preferred_element_type=jnp.float32) + b_f)  # (1, H)
        # Fused mask M(l) = a*v_T(l % W) + b*v_F(l // W) + c, shape (1, L).
        mask = (a * jnp.dot(v_t, p_tt, preferred_element_type=jnp.float32)
                + b * jnp.dot(v_f, p_ft, preferred_element_type=jnp.float32)
                + c)
        o_ref[n] = (xn * mask).astype(o_ref.dtype)   # single elementwise apply


def _choose_batch_block(n, c, l, itemsize, max_unroll=8, target_bytes=8 << 20):
    """Pick Nb (batch elems per grid step): big blocks, >=2 steps, divides N."""
    per_n = 4 * c * l * itemsize                 # in + out, double buffered
    nb = max(1, target_bytes // per_n)
    nb = int(min(nb, max_unroll, n))
    if n >= 2:
        nb = min(nb, n // 2)                     # keep >= 2 grid steps (v7x megacore)
    nb = max(nb, 1)
    while n % nb:                                # full blocks only
        nb -= 1
    return nb


def parallel_attention_mask(x, conv_T_w, conv_T_b, conv_F_w, conv_F_b, weights):
    """x: (N, C, H, W). conv_*_w: (C,), conv_*_b: (1,), weights: (3,)."""
    N, C, H, W = x.shape
    L = H * W
    x_flat = x.reshape(N, C, L)                  # free: NCHW is contiguous in (H, W)

    # Parameter glue (tiny, done outside the kernel).
    abc = jax.nn.softmax(weights.astype(jnp.float32))
    scalars = jnp.concatenate(
        [conv_T_b.reshape(1).astype(jnp.float32),
         conv_F_b.reshape(1).astype(jnp.float32),
         abc])                                                        # (5,)
    w2 = jnp.stack([conv_T_w.reshape(C),
                    conv_F_w.reshape(C)]).astype(jnp.float32)         # (2, C)

    # Constant 0/1 selector matrices (mean scale folded into the reduce side).
    l_idx = jnp.arange(L, dtype=jnp.int32)
    p_t = (l_idx[:, None] % W == jnp.arange(W, dtype=jnp.int32)[None, :])
    p_f = (l_idx[:, None] // W == jnp.arange(H, dtype=jnp.int32)[None, :])
    p_t_red = p_t.astype(jnp.float32) / float(H)                      # (L, W)
    p_f_red = p_f.astype(jnp.float32) / float(W)                      # (L, H)
    p_t_exp = p_t.astype(jnp.float32).T                               # (W, L)
    p_f_exp = p_f.astype(jnp.float32).T                               # (H, L)

    itemsize = jnp.dtype(x.dtype).itemsize
    Nb = _choose_batch_block(N, C, L, itemsize)
    grid = (N // Nb,)

    # Explicit VMEM budget: double-buffered in/out blocks + constants + margin.
    block_bytes = Nb * C * L * itemsize
    const_bytes = (2 * C + 2 * L * W + 2 * L * H) * 4
    vmem_need = 4 * block_bytes + 2 * const_bytes + (2 << 20)
    vmem_limit = int(min(max(vmem_need, 32 << 20), 48 << 20))

    out_flat = pl.pallas_call(
        _pam_kernel,
        out_shape=jax.ShapeDtypeStruct((N, C, L), x.dtype),
        grid=grid,
        in_specs=[
            pl.BlockSpec(memory_space=pltpu.MemorySpace.SMEM),        # scalars
            pl.BlockSpec((2, C), lambda i: (0, 0)),                   # w2
            pl.BlockSpec((L, W), lambda i: (0, 0)),                   # p_t_red
            pl.BlockSpec((W, L), lambda i: (0, 0)),                   # p_t_exp
            pl.BlockSpec((L, H), lambda i: (0, 0)),                   # p_f_red
            pl.BlockSpec((H, L), lambda i: (0, 0)),                   # p_f_exp
            pl.BlockSpec((Nb, C, L), lambda i: (i, 0, 0)),            # x
        ],
        out_specs=pl.BlockSpec((Nb, C, L), lambda i: (i, 0, 0)),
        compiler_params=pltpu.CompilerParams(
            dimension_semantics=("parallel",),
            vmem_limit_bytes=vmem_limit,
        ),
    )(scalars, w2, p_t_red, p_t_exp, p_f_red, p_f_exp, x_flat)

    return out_flat.reshape(N, C, H, W)


def _reference(x, conv_T_w, conv_T_b, conv_F_w, conv_F_b, weights):
    # Pure-JAX mirror of the PyTorch forward (NCHW).
    V_T = jnp.sum(x * conv_T_w[None, :, None, None], axis=1, keepdims=True) + conv_T_b
    V_F = jnp.sum(x * conv_F_w[None, :, None, None], axis=1, keepdims=True) + conv_F_b
    v_T = jax.nn.sigmoid(jnp.mean(V_T, axis=2, keepdims=True))   # (N,1,1,W)
    v_F = jax.nn.sigmoid(jnp.mean(V_F, axis=3, keepdims=True))   # (N,1,H,1)
    a, b, c = jax.nn.softmax(weights)
    return a * (x * v_T) + b * (x * v_F) + c * x


if __name__ == "__main__":
    N, C, H, W = 2, 4, 16, 16

    key = jax.random.PRNGKey(0)
    kx, kwT, kbT, kwF, kbF = jax.random.split(key, 5)

    x = jax.random.normal(kx, (N, C, H, W), dtype=jnp.float32)

    # Deterministic synthetic parameters (shapes match nn.Conv2d(C,1,1) + weights=ones(3)).
    conv_T_w = jax.random.normal(kwT, (C,), dtype=jnp.float32) * 0.5
    conv_T_b = jax.random.normal(kbT, (1,), dtype=jnp.float32) * 0.1
    conv_F_w = jax.random.normal(kwF, (C,), dtype=jnp.float32) * 0.5
    conv_F_b = jax.random.normal(kbF, (1,), dtype=jnp.float32) * 0.1
    weights = jnp.ones((3,), dtype=jnp.float32)   # matches torch.ones(3) init

    out = parallel_attention_mask(x, conv_T_w, conv_T_b, conv_F_w, conv_F_b, weights)
    out = jax.block_until_ready(out)

    ref = _reference(x, conv_T_w, conv_T_b, conv_F_w, conv_F_b, weights)
    # Tolerance allows for the MXU possibly running f32 contractions as
    # bf16 multi-pass (worst case ~3e-3 abs here); semantic errors are >> this.
    np.testing.assert_allclose(np.asarray(out), np.asarray(ref), rtol=1e-2, atol=1e-2)

    print("KERNEL_OK")
</pallas_src>

<mosaic_0001>
module attributes {stable_mosaic.version = 11 : i64} {
  func.func @_pam_kernel(%arg0: i32, %arg1: memref<5xf32, #tpu.memory_space<smem>>, %arg2: memref<2x4xf32, #tpu.memory_space<vmem>>, %arg3: memref<256x16xf32, #tpu.memory_space<vmem>>, %arg4: memref<16x256xf32, #tpu.memory_space<vmem>>, %arg5: memref<256x16xf32, #tpu.memory_space<vmem>>, %arg6: memref<16x256xf32, #tpu.memory_space<vmem>>, %arg7: memref<1x4x256xf32, #tpu.memory_space<vmem>>, %arg8: memref<1x4x256xf32, #tpu.memory_space<vmem>>) attributes {dimension_semantics = [#tpu.dimension_semantics<parallel>], iteration_bounds = array<i64: 2>, scalar_prefetch = 0 : i64, scratch_operands = 0 : i64, tpu.core_type = #tpu.core_type<tc>, window_params = [{transform_indices = @transform_0, window_bounds = array<i64: 5>}, {pipeline_mode = #tpu.pipeline_mode<synchronous>, transform_indices = @transform_1, window_bounds = array<i64: 2, 4>}, {pipeline_mode = #tpu.pipeline_mode<synchronous>, transform_indices = @transform_2, window_bounds = array<i64: 256, 16>}, {pipeline_mode = #tpu.pipeline_mode<synchronous>, transform_indices = @transform_3, window_bounds = array<i64: 16, 256>}, {pipeline_mode = #tpu.pipeline_mode<synchronous>, transform_indices = @transform_4, window_bounds = array<i64: 256, 16>}, {pipeline_mode = #tpu.pipeline_mode<synchronous>, transform_indices = @transform_5, window_bounds = array<i64: 16, 256>}, {transform_indices = @transform_6, window_bounds = array<i64: 1, 4, 256>}, {transform_indices = @transform_7, window_bounds = array<i64: 1, 4, 256>}]} {
    %c0 = arith.constant 0 : index
    %0 = memref.load %arg1[%c0] : memref<5xf32, #tpu.memory_space<smem>>
    %c1 = arith.constant 1 : index
    %1 = memref.load %arg1[%c1] : memref<5xf32, #tpu.memory_space<smem>>
    %c2 = arith.constant 2 : index
    %2 = memref.load %arg1[%c2] : memref<5xf32, #tpu.memory_space<smem>>
    %c3 = arith.constant 3 : index
    %3 = memref.load %arg1[%c3] : memref<5xf32, #tpu.memory_space<smem>>
    %c4 = arith.constant 4 : index
    %4 = memref.load %arg1[%c4] : memref<5xf32, #tpu.memory_space<smem>>
    %c0_0 = arith.constant 0 : index
    %c0_1 = arith.constant 0 : index
    %5 = vector.load %arg2[%c0_0, %c0_1] : memref<2x4xf32, #tpu.memory_space<vmem>>, vector<2x4xf32>
    %c0_2 = arith.constant 0 : index
    %c0_3 = arith.constant 0 : index
    %6 = vector.load %arg3[%c0_2, %c0_3] : memref<256x16xf32, #tpu.memory_space<vmem>>, vector<256x16xf32>
    %c0_4 = arith.constant 0 : index
    %c0_5 = arith.constant 0 : index
    %7 = vector.load %arg4[%c0_4, %c0_5] : memref<16x256xf32, #tpu.memory_space<vmem>>, vector<16x256xf32>
    %c0_6 = arith.constant 0 : index
    %c0_7 = arith.constant 0 : index
    %8 = vector.load %arg5[%c0_6, %c0_7] : memref<256x16xf32, #tpu.memory_space<vmem>>, vector<256x16xf32>
    %c0_8 = arith.constant 0 : index
    %c0_9 = arith.constant 0 : index
    %9 = vector.load %arg6[%c0_8, %c0_9] : memref<16x256xf32, #tpu.memory_space<vmem>>, vector<16x256xf32>
    %c0_10 = arith.constant 0 : index
    %c0_11 = arith.constant 0 : index
    %c0_12 = arith.constant 0 : index
    %10 = vector.load %arg7[%c0_10, %c0_11, %c0_12] : memref<1x4x256xf32, #tpu.memory_space<vmem>>, vector<1x4x256xf32>
    %11 = vector.shape_cast %10 : vector<1x4x256xf32> to vector<4x256xf32>
    %cst = arith.constant dense<0.000000e+00> : vector<2x256xf32>
    %12 = tpu.matmul %5, %11, %cst {dimension_numbers = #tpu.dot_dimension_numbers<[1], [0], [0], [1], [0, 0, 1, 1], [], []>} : vector<2x4xf32>, vector<4x256xf32>, vector<2x256xf32> -> vector<2x256xf32>
    %13 = vector.extract_strided_slice %12 {offsets = [0, 0], sizes = [1, 256], strides = [1, 1]} : vector<2x256xf32> to vector<1x256xf32>
    %cst_13 = arith.constant dense<0.000000e+00> : vector<1x16xf32>
    %14 = tpu.matmul %13, %6, %cst_13 {dimension_numbers = #tpu.dot_dimension_numbers<[1], [0], [0], [1], [0, 0, 1, 1], [], []>} : vector<1x256xf32>, vector<256x16xf32>, vector<1x16xf32> -> vector<1x16xf32>
    %15 = vector.broadcast %0 : f32 to vector<1x16xf32>
    %16 = arith.addf %14, %15 : vector<1x16xf32>
    %17 = arith.negf %16 : vector<1x16xf32>
    %18 = math.exp %17 : vector<1x16xf32>
    %cst_14 = arith.constant 1.000000e+00 : f32
    %19 = vector.broadcast %cst_14 : f32 to vector<1x16xf32>
    %20 = arith.addf %19, %18 : vector<1x16xf32>
    %21 = arith.divf %19, %20 : vector<1x16xf32>
    %22 = vector.extract_strided_slice %12 {offsets = [1, 0], sizes = [1, 256], strides = [1, 1]} : vector<2x256xf32> to vector<1x256xf32>
    %cst_15 = arith.constant dense<0.000000e+00> : vector<1x16xf32>
    %23 = tpu.matmul %22, %8, %cst_15 {dimension_numbers = #tpu.dot_dimension_numbers<[1], [0], [0], [1], [0, 0, 1, 1], [], []>} : vector<1x256xf32>, vector<256x16xf32>, vector<1x16xf32> -> vector<1x16xf32>
    %24 = vector.broadcast %1 : f32 to vector<1x16xf32>
    %25 = arith.addf %23, %24 : vector<1x16xf32>
    %26 = arith.negf %25 : vector<1x16xf32>
    %27 = math.exp %26 : vector<1x16xf32>
    %cst_16 = arith.constant 1.000000e+00 : f32
    %28 = vector.broadcast %cst_16 : f32 to vector<1x16xf32>
    %29 = arith.addf %28, %27 : vector<1x16xf32>
    %30 = arith.divf %28, %29 : vector<1x16xf32>
    %cst_17 = arith.constant dense<0.000000e+00> : vector<1x256xf32>
    %31 = tpu.matmul %21, %7, %cst_17 {dimension_numbers = #tpu.dot_dimension_numbers<[1], [0], [0], [1], [0, 0, 1, 1], [], []>} : vector<1x16xf32>, vector<16x256xf32>, vector<1x256xf32> -> vector<1x256xf32>
    %32 = vector.broadcast %2 : f32 to vector<1x256xf32>
    %33 = arith.mulf %32, %31 : vector<1x256xf32>
    %cst_18 = arith.constant dense<0.000000e+00> : vector<1x256xf32>
    %34 = tpu.matmul %30, %9, %cst_18 {dimension_numbers = #tpu.dot_dimension_numbers<[1], [0], [0], [1], [0, 0, 1, 1], [], []>} : vector<1x16xf32>, vector<16x256xf32>, vector<1x256xf32> -> vector<1x256xf32>
    %35 = vector.broadcast %3 : f32 to vector<1x256xf32>
    %36 = arith.mulf %35, %34 : vector<1x256xf32>
    %37 = arith.addf %33, %36 : vector<1x256xf32>
    %38 = vector.broadcast %4 : f32 to vector<1x256xf32>
    %39 = arith.addf %37, %38 : vector<1x256xf32>
    %40 = vector.broadcast %39 : vector<1x256xf32> to vector<4x256xf32>
    %41 = arith.mulf %11, %40 : vector<4x256xf32>
    %c0_19 = arith.constant 0 : index
    %c0_20 = arith.constant 0 : index
    %c0_21 = arith.constant 0 : index
    %42 = vector.load %arg8[%c0_19, %c0_20, %c0_21] : memref<1x4x256xf32, #tpu.memory_space<vmem>>, vector<1x4x256xf32>
    %43 = vector.shape_cast %42 : vector<1x4x256xf32> to vector<4x256xf32>
    %44 = vector.shape_cast %41 : vector<4x256xf32> to vector<1x4x256xf32>
    tpu.vector_store %arg8[%c0_19, %c0_20, %c0_21], %44 {strides = array<i32>} : memref<1x4x256xf32, #tpu.memory_space<vmem>>, vector<1x4x256xf32>,
    return
  }
  func.func @transform_0(%arg0: i32) -> i32 {
    %c0_i32 = arith.constant 0 : i32
    %c0_i32_0 = arith.constant 0 : i32
    return %c0_i32 : i32
  }
  func.func @transform_1(%arg0: i32) -> (i32, i32) {
    %c0_i32 = arith.constant 0 : i32
    %c0_i32_0 = arith.constant 0 : i32
    %c0_i32_1 = arith.constant 0 : i32
    return %c0_i32, %c0_i32_0 : i32, i32
  }
  func.func @transform_2(%arg0: i32) -> (i32, i32) {
    %c0_i32 = arith.constant 0 : i32
    %c0_i32_0 = arith.constant 0 : i32
    %c0_i32_1 = arith.constant 0 : i32
    return %c0_i32, %c0_i32_0 : i32, i32
  }
  func.func @transform_3(%arg0: i32) -> (i32, i32) {
    %c0_i32 = arith.constant 0 : i32
    %c0_i32_0 = arith.constant 0 : i32
    %c0_i32_1 = arith.constant 0 : i32
    return %c0_i32, %c0_i32_0 : i32, i32
  }
  func.func @transform_4(%arg0: i32) -> (i32, i32) {
    %c0_i32 = arith.constant 0 : i32
    %c0_i32_0 = arith.constant 0 : i32
    %c0_i32_1 = arith.constant 0 : i32
    return %c0_i32, %c0_i32_0 : i32, i32
  }
  func.func @transform_5(%arg0: i32) -> (i32, i32) {
    %c0_i32 = arith.constant 0 : i32
    %c0_i32_0 = arith.constant 0 : i32
    %c0_i32_1 = arith.constant 0 : i32
    return %c0_i32, %c0_i32_0 : i32, i32
  }
  func.func @transform_6(%arg0: i32) -> (i32, i32, i32) {
    %c0_i32 = arith.constant 0 : i32
    %c0_i32_0 = arith.constant 0 : i32
    %c0_i32_1 = arith.constant 0 : i32
    return %arg0, %c0_i32, %c0_i32_0 : i32, i32, i32
  }
  func.func @transform_7(%arg0: i32) -> (i32, i32, i32) {
    %c0_i32 = arith.constant 0 : i32
    %c0_i32_0 = arith.constant 0 : i32
    %c0_i32_1 = arith.constant 0 : i32
    return %arg0, %c0_i32, %c0_i32_0 : i32, i32, i32
  }
}

</mosaic_0001>

<llo_original>
// kernel: tpu_custom_call.1
$region0: #{tpu_custom_call.1}
  #allocation0 [shape = 'u32[]', space=smem, size = 0x4, offset = 0x4, fixed_abs, tag = 'smem constant byte address 0x4 - core index']
  #allocation1 [shape = 'u32[144,128]{1,0:T(1,128)}', space=vmem, size = 0x12000, scoped, tag = 'internal scratch']
  %s0 = inlined_call_operand.vmem [shape: f32[5], index: 0, kind: input, shape index: {}]
  %s1 = inlined_call_operand.vmem [shape: f32[2,4], index: 1, kind: input, shape index: {}]
  %s2 = inlined_call_operand.vmem [shape: f32[256,16], index: 2, kind: input, shape index: {}]
  %s3 = inlined_call_operand.vmem [shape: f32[16,256], index: 3, kind: input, shape index: {}]
  %s4 = inlined_call_operand.vmem [shape: f32[256,16], index: 4, kind: input, shape index: {}]
  %s5 = inlined_call_operand.vmem [shape: f32[16,256], index: 5, kind: input, shape index: {}]
  %s6 = inlined_call_operand.vmem [shape: f32[2,4,256], index: 6, kind: input, shape index: {}]
  %s7 = inlined_call_operand.hbm [shape: f32[2,4,256], index: 7, kind: output, shape index: {}]
  %s8 = sld [smem:[#allocation0]]
  $region65: #{tpu_custom_call.1} parent=0
    _
  %s10 = ssub.s32 1, %s8
  %s11 = scalar_select 0, %s10, %s8
  $region1: #{tpu_custom_call.1} parent=0
    #allocation2 [shape = 'u8[512]{0}', space=smem, size = 0x200, scoped, tag = 'input window, operand 0, single buffered']
    #allocation3 [shape = 's32[2]{0}', space=sflag, size = 0x8, scoped, tag = 'scoped memory for tpu_custom_call.1']
    #allocation4 [shape = 's32[2]{0}', space=sflag, size = 0x8, scoped, tag = 'scoped memory for tpu_custom_call.1']
    #allocation5 [shape = 'u8[8192]{0}', space=vmem, size = 0x2000, scoped, tag = 'output window, operand 0']
    %12 = vsyncpa [#allocation4], 0
    %13 = vsyncpa [#allocation3], 0
    %s14 = scalar_lea.sflag [#allocation3], 1
    %15 = vsyncpa %s14, 0
    loop: start=0, step=1, limit=4
    $region2: #{tpu_custom_call.1} parent=1 // loop_pre_header
      _
    $region3: #{tpu_custom_call.1} parent=1 // loop_header
      %s17 = sphi 0, %s21
      %p18 = scmp.ge.s32.totalorder %s17, 4
      %s25 = sphi 0, %s25
      %s27 = sphi 0, %s25
      %s28 = sphi 0, %s27
      %s42 = sphi 0, %s28
      %s46 = sphi 0, %s46
      %s48 = sphi 0, %s46
      %s49 = sphi 0, %s48
      %s63 = sphi 0, %s49
      %s67 = sphi 0, %s67
      %s69 = sphi 0, %s67
      %s70 = sphi 0, %s69
      %s84 = sphi 0, %s70
      %s88 = sphi 0, %s88
      %s90 = sphi 0, %s88
      %s91 = sphi 0, %s90
      %s105 = sphi 0, %s91
      %s109 = sphi 0, %s109
      %s111 = sphi 0, %s109
      %s112 = sphi 0, %s111
      %s126 = sphi 0, %s112
      %s130 = sphi 0, %s130
      %s132 = sphi 0, %s130
      %s133 = sphi 0, %s132
      %s147 = sphi 0, %s133
      %s153 = sphi 0, %s155
      %s156 = sphi 0, %s153
      %s157 = sphi 0, %s156
      %s173 = sphi 0, %s157
      %s179 = sphi 0, %s181
      %s182 = sphi 0, %s179
      %s183 = sphi 0, %s182
      %s199 = sphi 0, %s183
    $region4: #{tpu_custom_call.1} parent=1 // loop_header_branch
      %20 = sbr.rel (%p18) target = $region8
    $region5: #{tpu_custom_call.1} parent=1 // loop_body
      %s22 = ssub.s32 %s17, 1
      %s23 = ssub.s32 %s17, 2
      %s24 = sadd.s32 %s17, 1
      %s26 = sadd.s32 %s25, 1
      %p29 = scmp.eq.s32.totalorder %s17, 1
      %p30 = scmp.ne.s32.totalorder %s25, %s27
      %p31 = scmp.eq.s32.totalorder %s17, 0
      %p32 = por %p30, %p31
      %p33 = scmp.ne.s32.totalorder %s25, %s27
      %p34 = scmp.eq.s32.totalorder %s22, 1
      %p35 = por %p33, %p34
      %p36 = scmp.ne.s32.totalorder %s27, %s28
      %p37 = scmp.eq.s32.totalorder %s22, 0
      %p38 = por %p36, %p37
      %p39 = scmp.ne.s32.totalorder %s27, %s28
      %p40 = scmp.eq.s32.totalorder %s23, 1
      %p41 = por %p39, %p40
      %p43 = scmp.ne.s32.totalorder %s28, %s42
      %p44 = scmp.eq.s32.totalorder %s23, 0
      %p45 = por %p43, %p44
      %s47 = sadd.s32 %s46, 1
      %p50 = scmp.eq.s32.totalorder %s17, 1
      %p51 = scmp.ne.s32.totalorder %s46, %s48
      %p52 = scmp.eq.s32.totalorder %s17, 0
      %p53 = por %p51, %p52
      %p54 = scmp.ne.s32.totalorder %s46, %s48
      %p55 = scmp.eq.s32.totalorder %s22, 1
      %p56 = por %p54, %p55
      %p57 = scmp.ne.s32.totalorder %s48, %s49
      %p58 = scmp.eq.s32.totalorder %s22, 0
      %p59 = por %p57, %p58
      %p60 = scmp.ne.s32.totalorder %s48, %s49
      %p61 = scmp.eq.s32.totalorder %s23, 1
      %p62 = por %p60, %p61
      %p64 = scmp.ne.s32.totalorder %s49, %s63
      %p65 = scmp.eq.s32.totalorder %s23, 0
      %p66 = por %p64, %p65
      %s68 = sadd.s32 %s67, 1
      %p71 = scmp.eq.s32.totalorder %s17, 1
      %p72 = scmp.ne.s32.totalorder %s67, %s69
      %p73 = scmp.eq.s32.totalorder %s17, 0
      %p74 = por %p72, %p73
      %p75 = scmp.ne.s32.totalorder %s67, %s69
      %p76 = scmp.eq.s32.totalorder %s22, 1
      %p77 = por %p75, %p76
      %p78 = scmp.ne.s32.totalorder %s69, %s70
      %p79 = scmp.eq.s32.totalorder %s22, 0
      %p80 = por %p78, %p79
      %p81 = scmp.ne.s32.totalorder %s69, %s70
      %p82 = scmp.eq.s32.totalorder %s23, 1
      %p83 = por %p81, %p82
      %p85 = scmp.ne.s32.totalorder %s70, %s84
      %p86 = scmp.eq.s32.totalorder %s23, 0
      %p87 = por %p85, %p86
      %s89 = sadd.s32 %s88, 1
      %p92 = scmp.eq.s32.totalorder %s17, 1
      %p93 = scmp.ne.s32.totalorder %s88, %s90
      %p94 = scmp.eq.s32.totalorder %s17, 0
      %p95 = por %p93, %p94
      %p96 = scmp.ne.s32.totalorder %s88, %s90
      %p97 = scmp.eq.s32.totalorder %s22, 1
      %p98 = por %p96, %p97
      %p99 = scmp.ne.s32.totalorder %s90, %s91
      %p100 = scmp.eq.s32.totalorder %s22, 0
      %p101 = por %p99, %p100
      %p102 = scmp.ne.s32.totalorder %s90, %s91
      %p103 = scmp.eq.s32.totalorder %s23, 1
      %p104 = por %p102, %p103
      %p106 = scmp.ne.s32.totalorder %s91, %s105
      %p107 = scmp.eq.s32.totalorder %s23, 0
      %p108 = por %p106, %p107
      %s110 = sadd.s32 %s109, 1
      %p113 = scmp.eq.s32.totalorder %s17, 1
      %p114 = scmp.ne.s32.totalorder %s109, %s111
      %p115 = scmp.eq.s32.totalorder %s17, 0
      %p116 = por %p114, %p115
      %p117 = scmp.ne.s32.totalorder %s109, %s111
      %p118 = scmp.eq.s32.totalorder %s22, 1
      %p119 = por %p117, %p118
      %p120 = scmp.ne.s32.totalorder %s111, %s112
      %p121 = scmp.eq.s32.totalorder %s22, 0
      %p122 = por %p120, %p121
      %p123 = scmp.ne.s32.totalorder %s111, %s112
      %p124 = scmp.eq.s32.totalorder %s23, 1
      %p125 = por %p123, %p124
      %p127 = scmp.ne.s32.totalorder %s112, %s126
      %p128 = scmp.eq.s32.totalorder %s23, 0
      %p129 = por %p127, %p128
      %s131 = sadd.s32 %s130, 1
      %p134 = scmp.eq.s32.totalorder %s17, 1
      %p135 = scmp.ne.s32.totalorder %s130, %s132
      %p136 = scmp.eq.s32.totalorder %s17, 0
      %p137 = por %p135, %p136
      %p138 = scmp.ne.s32.totalorder %s130, %s132
      %p139 = scmp.eq.s32.totalorder %s22, 1
      %p140 = por %p138, %p139
      %p141 = scmp.ne.s32.totalorder %s132, %s133
      %p142 = scmp.eq.s32.totalorder %s22, 0
      %p143 = por %p141, %p142
      %p144 = scmp.ne.s32.totalorder %s132, %s133
      %p145 = scmp.eq.s32.totalorder %s23, 1
      %p146 = por %p144, %p145
      %p148 = scmp.ne.s32.totalorder %s133, %s147
      %p149 = scmp.eq.s32.totalorder %s23, 0
      %p150 = por %p148, %p149
      %s151 = ssub.s32 %s17, %s24
      %p152 = scmp.eq.s32.totalorder %s151, 0
      %s154 = sadd.s32 %s153, 1
      %s155 = scalar_select %p152, %s153, %s154
      %p158 = pneg %p152
      %p159 = scmp.eq.s32.totalorder %s17, 1
      %p160 = por %p158, %p159
      %p161 = scmp.ne.s32.totalorder %s153, %s156
      %p162 = scmp.eq.s32.totalorder %s17, 0
      %p163 = por %p161, %p162
      %p164 = scmp.ne.s32.totalorder %s153, %s156
      %p165 = scmp.eq.s32.totalorder %s22, 1
      %p166 = por %p164, %p165
      %p167 = scmp.ne.s32.totalorder %s156, %s157
      %p168 = scmp.eq.s32.totalorder %s22, 0
      %p169 = por %p167, %p168
      %p170 = scmp.ne.s32.totalorder %s156, %s157
      %p171 = scmp.eq.s32.totalorder %s23, 1
      %p172 = por %p170, %p171
      %p174 = scmp.ne.s32.totalorder %s157, %s173
      %p175 = scmp.eq.s32.totalorder %s23, 0
      %p176 = por %p174, %p175
      %s177 = ssub.s32 %s17, %s24
      %p178 = scmp.eq.s32.totalorder %s177, 0
      %s180 = sadd.s32 %s179, 1
      %s181 = scalar_select %p178, %s179, %s180
      %p184 = pneg %p178
      %p185 = scmp.eq.s32.totalorder %s17, 1
      %p186 = por %p184, %p185
      %p187 = scmp.ne.s32.totalorder %s179, %s182
      %p188 = scmp.eq.s32.totalorder %s17, 0
      %p189 = por %p187, %p188
      %p190 = scmp.ne.s32.totalorder %s179, %s182
      %p191 = scmp.eq.s32.totalorder %s22, 1
      %p192 = por %p190, %p191
      %p193 = scmp.ne.s32.totalorder %s182, %s183
      %p194 = scmp.eq.s32.totalorder %s22, 0
      %p195 = por %p193, %p194
      %p196 = scmp.ne.s32.totalorder %s182, %s183
      %p197 = scmp.eq.s32.totalorder %s23, 1
      %p198 = por %p196, %p197
      %p200 = scmp.ne.s32.totalorder %s183, %s199
      %p201 = scmp.eq.s32.totalorder %s23, 0
      %p202 = por %p200, %p201
      %p203 = scmp.le.s32.totalorder 1, %s17
      %p204 = scmp.lt.s32.totalorder %s17, 3
      %p205 = pnand %p203, %p204
      %p206 = pneg %p205
      // Predicated region
      $region9: #{tpu_custom_call.1} parent=5 // pred_check
        _
      $region10: #{tpu_custom_call.1} parent=5 // pred_check_branch
        %208 = sbr.rel (%p205) target = $region12
      $region11: #{tpu_custom_call.1} parent=5 // pred_region
        %s209 = ssub.s32 %s17, 1
        // Predicated region
        $region13: #{tpu_custom_call.1} parent=11 // pred_check
          %p210 = pneg %p38
        $region14: #{tpu_custom_call.1} parent=11 // pred_check_branch
          %212 = sbr.rel (%p210) target = $region16
        $region15: #{tpu_custom_call.1} parent=11 // pred_region
          %s214 = ssub.s32 16, 16
          %215 = vsyncadd [#allocation4], %s214
          %s217 = sshll.u32 %s0, 4
          %s218 = int_to_ptr.vmem [resolvable:$true] %s217
          %220 = dma.vmem_to_smem %s218, 16, [#allocation2], [#allocation4]
        $region16: #{tpu_custom_call.1} parent=11 // pred_fallthru
          _
        // Predicated region
        $region17: #{tpu_custom_call.1} parent=11 // pred_check
          %p221 = pneg %p59
        $region18: #{tpu_custom_call.1} parent=11 // pred_check_branch
          %223 = sbr.rel (%p221) target = $region20
        $region19: #{tpu_custom_call.1} parent=11 // pred_region
          _
        $region20: #{tpu_custom_call.1} parent=11 // pred_fallthru
          _
        // Predicated region
        $region21: #{tpu_custom_call.1} parent=11 // pred_check
          %p224 = pneg %p80
        $region22: #{tpu_custom_call.1} parent=11 // pred_check_branch
          %226 = sbr.rel (%p224) target = $region24
        $region23: #{tpu_custom_call.1} parent=11 // pred_region
          _
        $region24: #{tpu_custom_call.1} parent=11 // pred_fallthru
          _
        // Predicated region
        $region25: #{tpu_custom_call.1} parent=11 // pred_check
          %p227 = pneg %p101
        $region26: #{tpu_custom_call.1} parent=11 // pred_check_branch
          %229 = sbr.rel (%p227) target = $region28
        $region27: #{tpu_custom_call.1} parent=11 // pred_region
          _
        $region28: #{tpu_custom_call.1} parent=11 // pred_fallthru
          _
        // Predicated region
        $region29: #{tpu_custom_call.1} parent=11 // pred_check
          %p230 = pneg %p122
        $region30: #{tpu_custom_call.1} parent=11 // pred_check_branch
          %232 = sbr.rel (%p230) target = $region32
        $region31: #{tpu_custom_call.1} parent=11 // pred_region
          _
        $region32: #{tpu_custom_call.1} parent=11 // pred_fallthru
          _
        // Predicated region
        $region33: #{tpu_custom_call.1} parent=11 // pred_check
          %p233 = pneg %p143
        $region34: #{tpu_custom_call.1} parent=11 // pred_check_branch
          %235 = sbr.rel (%p233) target = $region36
        $region35: #{tpu_custom_call.1} parent=11 // pred_region
          _
        $region36: #{tpu_custom_call.1} parent=11 // pred_fallthru
          _
      $region12: #{tpu_custom_call.1} parent=5 // pred_fallthru
        _
      %p236 = scmp.lt.s32.totalorder %s17, 2
      // Predicated region
      $region37: #{tpu_custom_call.1} parent=5 // pred_check
        %p237 = pneg %p236
      $region38: #{tpu_custom_call.1} parent=5 // pred_check_branch
        %239 = sbr.rel (%p237) target = $region40
      $region39: #{tpu_custom_call.1} parent=5 // pred_region
        // Predicated region
        $region41: #{tpu_custom_call.1} parent=39 // pred_check
          %p240 = pneg %p163
        $region42: #{tpu_custom_call.1} parent=39 // pred_check_branch
          %242 = sbr.rel (%p240) target = $region44
        $region43: #{tpu_custom_call.1} parent=39 // pred_region
          %p243 = scmp.lt.s32.totalorder %s17, 1
          %s244 = scalar_select %p243, %s17, 1
          %s245 = smul.addr %s244, 2
          %s246 = smul.addr %s245, 4
          %s247 = scalar_lea.vmem %s6, %s246
        $region44: #{tpu_custom_call.1} parent=39 // pred_fallthru
          _
      $region40: #{tpu_custom_call.1} parent=5 // pred_fallthru
        _
      %p248 = scmp.le.s32.totalorder 1, %s17
      %p249 = scmp.lt.s32.totalorder %s17, 3
      %p250 = pnand %p248, %p249
      %p251 = pneg %p250
      // Predicated region
      $region45: #{tpu_custom_call.1} parent=5 // pred_check
        _
      $region46: #{tpu_custom_call.1} parent=5 // pred_check_branch
        %253 = sbr.rel (%p250) target = $region48
      $region47: #{tpu_custom_call.1} parent=5 // pred_region
        %s254 = ssub.s32 %s17, 1
        // Predicated region
        $region49: #{tpu_custom_call.1} parent=47 // pred_check
          %p255 = pneg %p38
        $region50: #{tpu_custom_call.1} parent=47 // pred_check_branch
          %257 = sbr.rel (%p255) target = $region52
        $region51: #{tpu_custom_call.1} parent=47 // pred_region
          %258 = dma.done [#allocation4], 16
        $region52: #{tpu_custom_call.1} parent=47 // pred_fallthru
          _
        %259 = sfence
        %p260 = pneg %p38
        %p261 = pneg %p35
        %p262 = pneg %p59
        %p263 = pneg %p56
        %p264 = pneg %p80
        %p265 = pneg %p77
        %p266 = pneg %p101
        %p267 = pneg %p98
        %p268 = pneg %p122
        %p269 = pneg %p119
        %p270 = pneg %p143
        %p271 = pneg %p140
        %p272 = scmp.lt.s32.totalorder %s22, 1
        %s273 = scalar_select %p272, %s22, 1
        %s274 = smul.addr %s273, 2
        %s275 = smul.addr %s274, 4
        %s276 = scalar_lea.vmem %s6, %s275
        %p277 = pneg %p169
        %p278 = pneg %p166
        %p279 = pneg %p195
        %p280 = pneg %p192
        %s281 = sand.u32 %s182, 1
        %s282 = scalar_lea.sflag [#allocation3], %s281
        %s283 = sand.u32 %s182, 1
        %s284 = smul.addr %s283, 8
        %s285 = scalar_lea.vmem [#allocation5], %s284
        %p286 = scmp.lt.s32.totalorder %s22, 1
        %s287 = scalar_select %p286, %s22, 1
        %s288 = smul.addr %s287, 2
        %s289 = smul.addr %s288, 4
        %s290 = scalar_lea.vmem %s6, %s289
        %s291 = sld [smem:[#allocation2]]
        %s292 = sld [smem:[#allocation2 + $0x1]]
        %s293 = sld [smem:[#allocation2 + $0x2]]
        %s294 = sld [smem:[#allocation2 + $0x3]]
        %s295 = sld [smem:[#allocation2 + $0x4]]
        %v296 = vld [vmem:[%s1] sm:$0x3]
        %v297 = vld [vmem:[%s2] sm:$0xff]
        %v298 = vld [vmem:[%s2 + $0x8] sm:$0xff]
        %v299 = vld [vmem:[%s2 + $0x10] sm:$0xff]
        %v300 = vld [vmem:[%s2 + $0x18] sm:$0xff]
        %v301 = vld [vmem:[%s2 + $0x20] sm:$0xff]
        %v302 = vld [vmem:[%s2 + $0x28] sm:$0xff]
        %v303 = vld [vmem:[%s2 + $0x30] sm:$0xff]
        %v304 = vld [vmem:[%s2 + $0x38] sm:$0xff]
        %v305 = vld [vmem:[%s2 + $0x40] sm:$0xff]
        %v306 = vld [vmem:[%s2 + $0x48] sm:$0xff]
        %v307 = vld [vmem:[%s2 + $0x50] sm:$0xff]
        %v308 = vld [vmem:[%s2 + $0x58] sm:$0xff]
        %v309 = vld [vmem:[%s2 + $0x60] sm:$0xff]
        %v310 = vld [vmem:[%s2 + $0x68] sm:$0xff]
        %v311 = vld [vmem:[%s2 + $0x70] sm:$0xff]
        %v312 = vld [vmem:[%s2 + $0x78] sm:$0xff]
        %v313 = vld [vmem:[%s2 + $0x80] sm:$0xff]
        %v314 = vld [vmem:[%s2 + $0x88] sm:$0xff]
        %v315 = vld [vmem:[%s2 + $0x90] sm:$0xff]
        %v316 = vld [vmem:[%s2 + $0x98] sm:$0xff]
        %v317 = vld [vmem:[%s2 + $0xa0] sm:$0xff]
        %v318 = vld [vmem:[%s2 + $0xa8] sm:$0xff]
        %v319 = vld [vmem:[%s2 + $0xb0] sm:$0xff]
        %v320 = vld [vmem:[%s2 + $0xb8] sm:$0xff]
        %v321 = vld [vmem:[%s2 + $0xc0] sm:$0xff]
        %v322 = vld [vmem:[%s2 + $0xc8] sm:$0xff]
        %v323 = vld [vmem:[%s2 + $0xd0] sm:$0xff]
        %v324 = vld [vmem:[%s2 + $0xd8] sm:$0xff]
        %v325 = vld [vmem:[%s2 + $0xe0] sm:$0xff]
        %v326 = vld [vmem:[%s2 + $0xe8] sm:$0xff]
        %v327 = vld [vmem:[%s2 + $0xf0] sm:$0xff]
        %v328 = vld [vmem:[%s2 + $0xf8] sm:$0xff]
        %v329 = vld [vmem:[%s3] sm:$0xff]
        %v330 = vld [vmem:[%s3 + $0x8] sm:$0xff]
        %v331 = vld [vmem:[%s3 + $0x10] sm:$0xff]
        %v332 = vld [vmem:[%s3 + $0x18] sm:$0xff]
        %v333 = vld [vmem:[%s4] sm:$0xff]
        %v334 = vld [vmem:[%s4 + $0x8] sm:$0xff]
        %v335 = vld [vmem:[%s4 + $0x10] sm:$0xff]
        %v336 = vld [vmem:[%s4 + $0x18] sm:$0xff]
        %v337 = vld [vmem:[%s4 + $0x20] sm:$0xff]
        %v338 = vld [vmem:[%s4 + $0x28] sm:$0xff]
        %v339 = vld [vmem:[%s4 + $0x30] sm:$0xff]
        %v340 = vld [vmem:[%s4 + $0x38] sm:$0xff]
        %v341 = vld [vmem:[%s4 + $0x40] sm:$0xff]
        %v342 = vld [vmem:[%s4 + $0x48] sm:$0xff]
        %v343 = vld [vmem:[%s4 + $0x50] sm:$0xff]
        %v344 = vld [vmem:[%s4 + $0x58] sm:$0xff]
        %v345 = vld [vmem:[%s4 + $0x60] sm:$0xff]
        %v346 = vld [vmem:[%s4 + $0x68] sm:$0xff]
        %v347 = vld [vmem:[%s4 + $0x70] sm:$0xff]
        %v348 = vld [vmem:[%s4 + $0x78] sm:$0xff]
        %v349 = vld [vmem:[%s4 + $0x80] sm:$0xff]
        %v350 = vld [vmem:[%s4 + $0x88] sm:$0xff]
        %v351 = vld [vmem:[%s4 + $0x90] sm:$0xff]
        %v352 = vld [vmem:[%s4 + $0x98] sm:$0xff]
        %v353 = vld [vmem:[%s4 + $0xa0] sm:$0xff]
        %v354 = vld [vmem:[%s4 + $0xa8] sm:$0xff]
        %v355 = vld [vmem:[%s4 + $0xb0] sm:$0xff]
        %v356 = vld [vmem:[%s4 + $0xb8] sm:$0xff]
        %v357 = vld [vmem:[%s4 + $0xc0] sm:$0xff]
        %v358 = vld [vmem:[%s4 + $0xc8] sm:$0xff]
        %v359 = vld [vmem:[%s4 + $0xd0] sm:$0xff]
        %v360 = vld [vmem:[%s4 + $0xd8] sm:$0xff]
        %v361 = vld [vmem:[%s4 + $0xe0] sm:$0xff]
        %v362 = vld [vmem:[%s4 + $0xe8] sm:$0xff]
        %v363 = vld [vmem:[%s4 + $0xf0] sm:$0xff]
        %v364 = vld [vmem:[%s4 + $0xf8] sm:$0xff]
        %v365 = vld [vmem:[%s5] sm:$0xff]
        %v366 = vld [vmem:[%s5 + $0x8] sm:$0xff]
        %v367 = vld [vmem:[%s5 + $0x10] sm:$0xff]
        %v368 = vld [vmem:[%s5 + $0x18] sm:$0xff]
        %v369 = vld [vmem:[%s290] sm:$0xff]
        %v371 = vcombine.high %v369, %v369
        %vm372 = vcmask 31744
        %v374 = vsel %vm372, %v296, 0
        %vm376 = vcmask 1043456
        %v377 = vsel %vm376, %v369, 0
        %v379 = vsel %vm376, %v371, 0
        %381 = vmatprep.subr.mxu0 0.0
        %382 = vmatpush1.msra.mxu0 0.0
        %383 = vmatprep.subr.mxu0 0.0
        %384 = vmatpush1.msra.mxu0 0.0
        %385 = vmatprep.subr.mxu0 0.0
        %386 = vmatpush1.msra.mxu0 0.0
        %387 = vmatprep.subr.mxu0 0.0
        %388 = vmatpush1.msra.mxu0 0.0
        %389 = vmatprep.subr.mxu0 0.0
        %390 = vmatpush1.msra.mxu0 0.0
        %391 = vmatprep.subr.mxu0 0.0
        %392 = vmatpush1.msra.mxu0 0.0
        %393 = vmatprep.subr.mxu0 0.0
        %394 = vmatpush1.msra.mxu0 0.0
        %395 = vmatprep.subr.mxu0 0.0
        %396 = vmatpush1.msra.mxu0 0.0
        %397 = vmatprep.subr.mxu0 0.0
        %398 = vmatpush1.msra.mxu0 0.0
        %399 = vmatprep.subr.mxu0 0.0
        %400 = vmatpush1.msra.mxu0 0.0
        %401 = vmatprep.subr.mxu0 0.0
        %402 = vmatpush1.msra.mxu0 0.0
        %403 = vmatprep.subr.mxu0 0.0
        %404 = vmatpush1.msra.mxu0 0.0
        %405 = vmatprep.subr.mxu0 0.0
        %406 = vmatpush1.msra.mxu0 0.0
        %407 = vmatprep.subr.mxu0 0.0
        %408 = vmatpush1.msra.mxu0 0.0
        %409 = vmatprep.subr.mxu0 0.0
        %410 = vmatpush1.msra.mxu0 0.0
        %411 = vmatprep.subr.mxu0 %v379
        %412 = vmatpush1.msra.mxu0 %v377
        %413 = vmatprep.subr.mxu0 0.0
        %414 = vmatpush2.msra.mxu0 0.0
        %415 = vmatprep.subr.mxu0 0.0
        %416 = vmatpush2.msra.mxu0 0.0
        %417 = vmatprep.subr.mxu0 0.0
        %418 = vmatpush2.msra.mxu0 0.0
        %419 = vmatprep.subr.mxu0 0.0
        %420 = vmatpush2.msra.mxu0 0.0
        %421 = vmatprep.subr.mxu0 0.0
        %422 = vmatpush2.msra.mxu0 0.0
        %423 = vmatprep.subr.mxu0 0.0
        %424 = vmatpush2.msra.mxu0 0.0
        %425 = vmatprep.subr.mxu0 0.0
        %426 = vmatpush2.msra.mxu0 0.0
        %427 = vmatprep.subr.mxu0 0.0
        %428 = vmatpush2.msra.mxu0 0.0
        %429 = vmatprep.subr.mxu0 0.0
        %430 = vmatpush2.msra.mxu0 0.0
        %431 = vmatprep.subr.mxu0 0.0
        %432 = vmatpush2.msra.mxu0 0.0
        %433 = vmatprep.subr.mxu0 0.0
        %434 = vmatpush2.msra.mxu0 0.0
        %435 = vmatprep.subr.mxu0 0.0
        %436 = vmatpush2.msra.mxu0 0.0
        %437 = vmatprep.subr.mxu0 0.0
        %438 = vmatpush2.msra.mxu0 0.0
        %439 = vmatprep.subr.mxu0 0.0
        %440 = vmatpush2.msra.mxu0 0.0
        %441 = vmatprep.subr.mxu0 0.0
        %442 = vmatpush2.msra.mxu0 0.0
        %443 = vmatprep.subr.mxu0 0.0
        %444 = vmatpush2.msra.mxu0 0.0
        %445 = vmatprep.mubr.f32.mxu0 0.0
        %446 = vmatmul.mubr.f32.gmra.mxu0 %v374
        %v447 = vpop.f32.mrf.mxu0
        %v448 = vadd.f32 0.0, %v447
        %v449 = vpop.f32.mrf.mxu0
        %v450 = vadd.f32 0.0, %v449
        %451 = vdwg.mxu0
        %v452 = vstv %s291
        %453 = vmatprep.subr.mxu0 0.0
        %454 = vmatpush1.msra.mxu0 %v312
        %455 = vmatprep.subr.mxu0 0.0
        %456 = vmatpush1.msra.mxu0 %v311
        %457 = vmatprep.subr.mxu0 0.0
        %458 = vmatpush1.msra.mxu0 %v310
        %459 = vmatprep.subr.mxu0 0.0
        %460 = vmatpush1.msra.mxu0 %v309
        %461 = vmatprep.subr.mxu0 0.0
        %462 = vmatpush1.msra.mxu0 %v308
        %463 = vmatprep.subr.mxu0 0.0
        %464 = vmatpush1.msra.mxu0 %v307
        %465 = vmatprep.subr.mxu0 0.0
        %466 = vmatpush1.msra.mxu0 %v306
        %467 = vmatprep.subr.mxu0 0.0
        %468 = vmatpush1.msra.mxu0 %v305
        %469 = vmatprep.subr.mxu0 0.0
        %470 = vmatpush1.msra.mxu0 %v304
        %471 = vmatprep.subr.mxu0 0.0
        %472 = vmatpush1.msra.mxu0 %v303
        %473 = vmatprep.subr.mxu0 0.0
        %474 = vmatpush1.msra.mxu0 %v302
        %475 = vmatprep.subr.mxu0 0.0
        %476 = vmatpush1.msra.mxu0 %v301
        %477 = vmatprep.subr.mxu0 0.0
        %478 = vmatpush1.msra.mxu0 %v300
        %479 = vmatprep.subr.mxu0 0.0
        %480 = vmatpush1.msra.mxu0 %v299
        %481 = vmatprep.subr.mxu0 0.0
        %482 = vmatpush1.msra.mxu0 %v298
        %483 = vmatprep.subr.mxu0 0.0
        %484 = vmatpush1.msra.mxu0 %v297
        %485 = vmatprep.subr.mxu0 0.0
        %486 = vmatpush2.msra.mxu0 %v328
        %487 = vmatprep.subr.mxu0 0.0
        %488 = vmatpush2.msra.mxu0 %v327
        %489 = vmatprep.subr.mxu0 0.0
        %490 = vmatpush2.msra.mxu0 %v326
        %491 = vmatprep.subr.mxu0 0.0
        %492 = vmatpush2.msra.mxu0 %v325
        %493 = vmatprep.subr.mxu0 0.0
        %494 = vmatpush2.msra.mxu0 %v324
        %495 = vmatprep.subr.mxu0 0.0
        %496 = vmatpush2.msra.mxu0 %v323
        %497 = vmatprep.subr.mxu0 0.0
        %498 = vmatpush2.msra.mxu0 %v322
        %499 = vmatprep.subr.mxu0 0.0
        %500 = vmatpush2.msra.mxu0 %v321
        %501 = vmatprep.subr.mxu0 0.0
        %502 = vmatpush2.msra.mxu0 %v320
        %503 = vmatprep.subr.mxu0 0.0
        %504 = vmatpush2.msra.mxu0 %v319
        %505 = vmatprep.subr.mxu0 0.0
        %506 = vmatpush2.msra.mxu0 %v318
        %507 = vmatprep.subr.mxu0 0.0
        %508 = vmatpush2.msra.mxu0 %v317
        %509 = vmatprep.subr.mxu0 0.0
        %510 = vmatpush2.msra.mxu0 %v316
        %511 = vmatprep.subr.mxu0 0.0
        %512 = vmatpush2.msra.mxu0 %v315
        %513 = vmatprep.subr.mxu0 0.0
        %514 = vmatpush2.msra.mxu0 %v314
        %515 = vmatprep.subr.mxu0 0.0
        %516 = vmatpush2.msra.mxu0 %v313
        %517 = vmatprep.mubr.f32.mxu0 %v450
        %518 = vmatmul.mubr.f32.gmra.mxu0 %v448
        %v519 = vpop.f32.mrf.mxu0
        %v520 = vadd.f32 %v452, %v519
        %v521 = vpop.f32.mrf.mxu0
        %522 = vdwg.mxu0
        %v523 = vxor.u32 %v520, 2147483648
        %v524 = vmul.f32 %v523, 1.442695
        %v525 = vpow.pop %v524
        %v526 = vadd.f32 %v525, 1.0
        %v527 = vrcp.pop %v526
        %v528 = vmul.f32 1.0, %v527
        %v529 = vstv %s292
        %v532 = vrot.slane %v448, 1
        %v533 = vrot.slane %v450, 1
        %536 = vmatprep.subr.mxu0 0.0
        %537 = vmatpush1.msra.mxu0 %v348
        %538 = vmatprep.subr.mxu0 0.0
        %539 = vmatpush1.msra.mxu0 %v347
        %540 = vmatprep.subr.mxu0 0.0
        %541 = vmatpush1.msra.mxu0 %v346
        %542 = vmatprep.subr.mxu0 0.0
        %543 = vmatpush1.msra.mxu0 %v345
        %544 = vmatprep.subr.mxu0 0.0
        %545 = vmatpush1.msra.mxu0 %v344
        %546 = vmatprep.subr.mxu0 0.0
        %547 = vmatpush1.msra.mxu0 %v343
        %548 = vmatprep.subr.mxu0 0.0
        %549 = vmatpush1.msra.mxu0 %v342
        %550 = vmatprep.subr.mxu0 0.0
        %551 = vmatpush1.msra.mxu0 %v341
        %552 = vmatprep.subr.mxu0 0.0
        %553 = vmatpush1.msra.mxu0 %v340
        %554 = vmatprep.subr.mxu0 0.0
        %555 = vmatpush1.msra.mxu0 %v339
        %556 = vmatprep.subr.mxu0 0.0
        %557 = vmatpush1.msra.mxu0 %v338
        %558 = vmatprep.subr.mxu0 0.0
        %559 = vmatpush1.msra.mxu0 %v337
        %560 = vmatprep.subr.mxu0 0.0
        %561 = vmatpush1.msra.mxu0 %v336
        %562 = vmatprep.subr.mxu0 0.0
        %563 = vmatpush1.msra.mxu0 %v335
        %564 = vmatprep.subr.mxu0 0.0
        %565 = vmatpush1.msra.mxu0 %v334
        %566 = vmatprep.subr.mxu0 0.0
        %567 = vmatpush1.msra.mxu0 %v333
        %568 = vmatprep.subr.mxu0 0.0
        %569 = vmatpush2.msra.mxu0 %v364
        %570 = vmatprep.subr.mxu0 0.0
        %571 = vmatpush2.msra.mxu0 %v363
        %572 = vmatprep.subr.mxu0 0.0
        %573 = vmatpush2.msra.mxu0 %v362
        %574 = vmatprep.subr.mxu0 0.0
        %575 = vmatpush2.msra.mxu0 %v361
        %576 = vmatprep.subr.mxu0 0.0
        %577 = vmatpush2.msra.mxu0 %v360
        %578 = vmatprep.subr.mxu0 0.0
        %579 = vmatpush2.msra.mxu0 %v359
        %580 = vmatprep.subr.mxu0 0.0
        %581 = vmatpush2.msra.mxu0 %v358
        %582 = vmatprep.subr.mxu0 0.0
        %583 = vmatpush2.msra.mxu0 %v357
        %584 = vmatprep.subr.mxu0 0.0
        %585 = vmatpush2.msra.mxu0 %v356
        %586 = vmatprep.subr.mxu0 0.0
        %587 = vmatpush2.msra.mxu0 %v355
        %588 = vmatprep.subr.mxu0 0.0
        %589 = vmatpush2.msra.mxu0 %v354
        %590 = vmatprep.subr.mxu0 0.0
        %591 = vmatpush2.msra.mxu0 %v353
        %592 = vmatprep.subr.mxu0 0.0
        %593 = vmatpush2.msra.mxu0 %v352
        %594 = vmatprep.subr.mxu0 0.0
        %595 = vmatpush2.msra.mxu0 %v351
        %596 = vmatprep.subr.mxu0 0.0
        %597 = vmatpush2.msra.mxu0 %v350
        %598 = vmatprep.subr.mxu0 0.0
        %599 = vmatpush2.msra.mxu0 %v349
        %600 = vmatprep.mubr.f32.mxu0 %v533
        %601 = vmatmul.mubr.f32.gmra.mxu0 %v532
        %v602 = vpop.f32.mrf.mxu0
        %v603 = vadd.f32 %v529, %v602
        %v604 = vpop.f32.mrf.mxu0
        %605 = vdwg.mxu0
        %v606 = vxor.u32 %v603, 2147483648
        %v607 = vmul.f32 %v606, 1.442695
        %v608 = vpow.pop %v607
        %v609 = vadd.f32 %v608, 1.0
        %v610 = vrcp.pop %v609
        %v611 = vmul.f32 1.0, %v610
        %vm612 = vcmask 130048
        %v614 = vsel %vm612, %v528, 0
        %616 = vmatprep.subr.mxu0 0.0
        %617 = vmatpush1.msra.mxu0 0.0
        %618 = vmatprep.subr.mxu0 0.0
        %619 = vmatpush1.msra.mxu0 0.0
        %620 = vmatprep.subr.mxu0 0.0
        %621 = vmatpush1.msra.mxu0 0.0
        %622 = vmatprep.subr.mxu0 0.0
        %623 = vmatpush1.msra.mxu0 0.0
        %624 = vmatprep.subr.mxu0 0.0
        %625 = vmatpush1.msra.mxu0 0.0
        %626 = vmatprep.subr.mxu0 0.0
        %627 = vmatpush1.msra.mxu0 0.0
        %628 = vmatprep.subr.mxu0 0.0
        %629 = vmatpush1.msra.mxu0 0.0
        %630 = vmatprep.subr.mxu0 0.0
        %631 = vmatpush1.msra.mxu0 0.0
        %632 = vmatprep.subr.mxu0 0.0
        %633 = vmatpush1.msra.mxu0 0.0
        %634 = vmatprep.subr.mxu0 0.0
        %635 = vmatpush1.msra.mxu0 0.0
        %636 = vmatprep.subr.mxu0 0.0
        %637 = vmatpush1.msra.mxu0 0.0
        %638 = vmatprep.subr.mxu0 0.0
        %639 = vmatpush1.msra.mxu0 0.0
        %640 = vmatprep.subr.mxu0 0.0
        %641 = vmatpush1.msra.mxu0 0.0
        %642 = vmatprep.subr.mxu0 0.0
        %643 = vmatpush1.msra.mxu0 0.0
        %644 = vmatprep.subr.mxu0 %v332
        %645 = vmatpush1.msra.mxu0 %v331
        %646 = vmatprep.subr.mxu0 %v330
        %647 = vmatpush1.msra.mxu0 %v329
        %648 = vmatprep.subr.mxu0 0.0
        %649 = vmatpush2.msra.mxu0 0.0
        %650 = vmatprep.subr.mxu0 0.0
        %651 = vmatpush2.msra.mxu0 0.0
        %652 = vmatprep.subr.mxu0 0.0
        %653 = vmatpush2.msra.mxu0 0.0
        %654 = vmatprep.subr.mxu0 0.0
        %655 = vmatpush2.msra.mxu0 0.0
        %656 = vmatprep.subr.mxu0 0.0
        %657 = vmatpush2.msra.mxu0 0.0
        %658 = vmatprep.subr.mxu0 0.0
        %659 = vmatpush2.msra.mxu0 0.0
        %660 = vmatprep.subr.mxu0 0.0
        %661 = vmatpush2.msra.mxu0 0.0
        %662 = vmatprep.subr.mxu0 0.0
        %663 = vmatpush2.msra.mxu0 0.0
        %664 = vmatprep.subr.mxu0 0.0
        %665 = vmatpush2.msra.mxu0 0.0
        %666 = vmatprep.subr.mxu0 0.0
        %667 = vmatpush2.msra.mxu0 0.0
        %668 = vmatprep.subr.mxu0 0.0
        %669 = vmatpush2.msra.mxu0 0.0
        %670 = vmatprep.subr.mxu0 0.0
        %671 = vmatpush2.msra.mxu0 0.0
        %672 = vmatprep.subr.mxu0 0.0
        %673 = vmatpush2.msra.mxu0 0.0
        %674 = vmatprep.subr.mxu0 0.0
        %675 = vmatpush2.msra.mxu0 0.0
        %676 = vmatprep.subr.mxu0 0.0
        %677 = vmatpush2.msra.mxu0 0.0
        %678 = vmatprep.subr.mxu0 0.0
        %679 = vmatpush2.msra.mxu0 0.0
        %680 = vmatprep.mubr.f32.mxu0 0.0
        %681 = vmatmul.mubr.f32.gmra.mxu0 %v614
        %v682 = vpop.f32.mrf.mxu0
        %v683 = vadd.f32 0.0, %v682
        %v684 = vpop.f32.mrf.mxu0
        %v685 = vadd.f32 0.0, %v684
        %686 = vdwg.mxu0
        %v687 = vstv %s293
        %v688 = vmul.f32 %v687, %v683
        %v689 = vmul.f32 %v687, %v685
        %v691 = vsel %vm612, %v611, 0
        %693 = vmatprep.subr.mxu0 0.0
        %694 = vmatpush1.msra.mxu0 0.0
        %695 = vmatprep.subr.mxu0 0.0
        %696 = vmatpush1.msra.mxu0 0.0
        %697 = vmatprep.subr.mxu0 0.0
        %698 = vmatpush1.msra.mxu0 0.0
        %699 = vmatprep.subr.mxu0 0.0
        %700 = vmatpush1.msra.mxu0 0.0
        %701 = vmatprep.subr.mxu0 0.0
        %702 = vmatpush1.msra.mxu0 0.0
        %703 = vmatprep.subr.mxu0 0.0
        %704 = vmatpush1.msra.mxu0 0.0
        %705 = vmatprep.subr.mxu0 0.0
        %706 = vmatpush1.msra.mxu0 0.0
        %707 = vmatprep.subr.mxu0 0.0
        %708 = vmatpush1.msra.mxu0 0.0
        %709 = vmatprep.subr.mxu0 0.0
        %710 = vmatpush1.msra.mxu0 0.0
        %711 = vmatprep.subr.mxu0 0.0
        %712 = vmatpush1.msra.mxu0 0.0
        %713 = vmatprep.subr.mxu0 0.0
        %714 = vmatpush1.msra.mxu0 0.0
        %715 = vmatprep.subr.mxu0 0.0
        %716 = vmatpush1.msra.mxu0 0.0
        %717 = vmatprep.subr.mxu0 0.0
        %718 = vmatpush1.msra.mxu0 0.0
        %719 = vmatprep.subr.mxu0 0.0
        %720 = vmatpush1.msra.mxu0 0.0
        %721 = vmatprep.subr.mxu0 %v368
        %722 = vmatpush1.msra.mxu0 %v367
        %723 = vmatprep.subr.mxu0 %v366
        %724 = vmatpush1.msra.mxu0 %v365
        %725 = vmatprep.subr.mxu0 0.0
        %726 = vmatpush2.msra.mxu0 0.0
        %727 = vmatprep.subr.mxu0 0.0
        %728 = vmatpush2.msra.mxu0 0.0
        %729 = vmatprep.subr.mxu0 0.0
        %730 = vmatpush2.msra.mxu0 0.0
        %731 = vmatprep.subr.mxu0 0.0
        %732 = vmatpush2.msra.mxu0 0.0
        %733 = vmatprep.subr.mxu0 0.0
        %734 = vmatpush2.msra.mxu0 0.0
        %735 = vmatprep.subr.mxu0 0.0
        %736 = vmatpush2.msra.mxu0 0.0
        %737 = vmatprep.subr.mxu0 0.0
        %738 = vmatpush2.msra.mxu0 0.0
        %739 = vmatprep.subr.mxu0 0.0
        %740 = vmatpush2.msra.mxu0 0.0
        %741 = vmatprep.subr.mxu0 0.0
        %742 = vmatpush2.msra.mxu0 0.0
        %743 = vmatprep.subr.mxu0 0.0
        %744 = vmatpush2.msra.mxu0 0.0
        %745 = vmatprep.subr.mxu0 0.0
        %746 = vmatpush2.msra.mxu0 0.0
        %747 = vmatprep.subr.mxu0 0.0
        %748 = vmatpush2.msra.mxu0 0.0
        %749 = vmatprep.subr.mxu0 0.0
        %750 = vmatpush2.msra.mxu0 0.0
        %751 = vmatprep.subr.mxu0 0.0
        %752 = vmatpush2.msra.mxu0 0.0
        %753 = vmatprep.subr.mxu0 0.0
        %754 = vmatpush2.msra.mxu0 0.0
        %755 = vmatprep.subr.mxu0 0.0
        %756 = vmatpush2.msra.mxu0 0.0
        %757 = vmatprep.mubr.f32.mxu0 0.0
        %758 = vmatmul.mubr.f32.gmra.mxu0 %v691
        %v759 = vpop.f32.mrf.mxu0
        %v760 = vadd.f32 0.0, %v759
        %v761 = vpop.f32.mrf.mxu0
        %v762 = vadd.f32 0.0, %v761
        %763 = vdwg.mxu0
        %v764 = vstv %s294
        %v765 = vmul.f32 %v764, %v760
        %v766 = vmul.f32 %v764, %v762
        %v767 = vadd.f32 %v688, %v765
        %v768 = vadd.f32 %v689, %v766
        %v769 = vstv %s295
        %v770 = vadd.f32 %v767, %v769
        %v771 = vadd.f32 %v768, %v769
        %v772 = vlaneseq
        %v773 = vshrl.u32 %v772, 7
        %v774 = vsub.s32 0, %v773
        %v775 = vrot.slane %v770, %v774
        %v776 = vlaneseq
        %v777 = vshrl.u32 %v776, 7
        %v778 = vsub.s32 0, %v777
        %v779 = vrot.slane %v771, %v778
        %v782 = vcombine.low %v775, %v779
        %v784 = vmul.f32 %v369, %v782
        %785 = vst [vmem:[%s285] sm:$0xff] %v784
        %s786 = sand.u32 %s182, 1
        %s787 = scalar_lea.sflag [#allocation3], %s786
        %s788 = sand.u32 %s182, 1
        %s789 = smul.addr %s788, 8
        %s790 = scalar_lea.vmem [#allocation5], %s789
        // Predicated region
        $region53: #{tpu_custom_call.1} parent=47 // pred_check
          %p791 = pneg %p192
        $region54: #{tpu_custom_call.1} parent=47 // pred_check_branch
          %793 = sbr.rel (%p791) target = $region56
        $region55: #{tpu_custom_call.1} parent=47 // pred_region
          %s795 = ssub.s32 128, 128
          %796 = vsyncadd %s787, %s795
          %s797 = smul.addr %s22, 2
          %s798 = smul.addr %s797, 64
          %s799 = scalar_lea.hbm %s7, %s798
          %s801 = sshll.u32 %s790, 4
          %s802 = int_to_ptr.vmem [resolvable:$true] %s801
          %804 = dma.vmem_to_hbm [thread:$0]  %s802, 128, %s799, %s787
        $region56: #{tpu_custom_call.1} parent=47 // pred_fallthru
          _
      $region48: #{tpu_custom_call.1} parent=5 // pred_fallthru
        _
      %p805 = scmp.le.s32.totalorder 2, %s17
      // Predicated region
      $region57: #{tpu_custom_call.1} parent=5 // pred_check
        %p806 = pneg %p805
      $region58: #{tpu_custom_call.1} parent=5 // pred_check_branch
        %808 = sbr.rel (%p806) target = $region60
      $region59: #{tpu_custom_call.1} parent=5 // pred_region
        %s809 = ssub.s32 %s17, 2
        // Predicated region
        $region61: #{tpu_custom_call.1} parent=59 // pred_check
          %p810 = pneg %p198
        $region62: #{tpu_custom_call.1} parent=59 // pred_check_branch
          %812 = sbr.rel (%p810) target = $region64
        $region63: #{tpu_custom_call.1} parent=59 // pred_region
          %s813 = sand.u32 %s183, 1
          %s814 = scalar_lea.sflag [#allocation3], %s813
          %s815 = sand.u32 %s183, 1
          %s816 = smul.addr %s815, 8
          %s817 = scalar_lea.vmem [#allocation5], %s816
          %818 = dma.done %s814, 128
        $region64: #{tpu_custom_call.1} parent=59 // pred_fallthru
          _
      $region60: #{tpu_custom_call.1} parent=5 // pred_fallthru
        _
    $region6: #{tpu_custom_call.1} parent=1 // loop_footer
      %s21 = sadd.s32 1, %s17
    $region7: #{tpu_custom_call.1} parent=1 // loop_footer_branch
      %16 = sbr.rel target = $region3
    $region8: #{tpu_custom_call.1} parent=1 // loop_exit
      _
    %819 = vsyncpa [#allocation3], 1
    %s820 = scalar_lea.sflag [#allocation3], 1
    %821 = vsyncpa %s820, 1
    %822 = vsyncpa [#allocation4], 1
    %s823 = scalar_lea.sflag [#allocation4], 1
    %824 = vsyncpa %s823, 1

</llo_original>
